<compile_context>
chip_gen: v5e
topology: v5e:2x2
jax: 0.10.0
libtpu: 0.0.40
codegen_flags: <defaults>
</compile_context>

<pallas_src>
import functools

import jax
import jax.numpy as jnp
import numpy as np
from jax import lax
from jax.experimental import pallas as pl
from jax.experimental.pallas import tpu as pltpu


def _round_up(v, m):
    return (v + m - 1) // m * m


# ----------------------------------------------------------------------------
# Pallas kernel: one (batch tile, time chunk) per grid iteration.
# Grid = (nb, nc); batch tiles are independent ("parallel"), time chunks are
# sequential ("arbitrary") and carry h/c in VMEM scratch.
# ----------------------------------------------------------------------------
def _lstm_chunk_kernel(x_ref, wih_ref, whh_ref, b_ref, h0_ref, c0_ref,
                       out_ref, hn_ref, cn_ref,
                       gx_scr, h_scr, c_scr, *, hidden_size, seq_len):
    ci = pl.program_id(1)                 # time-chunk index (sequential axis)
    H = hidden_size
    Tb = out_ref.shape[0]                 # timesteps in this chunk

    # Load the initial hidden/cell state of this batch tile into the carries.
    @pl.when(ci == 0)
    def _():
        h_scr[...] = h0_ref[...]
        c_scr[...] = c0_ref[...]

    # ---- Hoisted input projection (off the recurrent critical path) --------
    # gx[t] = W_ih @ x_t + (b_ih + b_hh), bf16 MXU matmuls with f32 accumulate,
    # staged into VMEM so the serial loop below only does the h @ W_hh matmul.
    def project(t, carry):
        gx_scr[t] = (jnp.dot(wih_ref[...], x_ref[t],
                             preferred_element_type=jnp.float32)
                     + b_ref[...])
        return carry

    lax.fori_loop(0, Tb, project, 0, unroll=min(Tb, 8))

    # ---- Sequential recurrence over the chunk -------------------------------
    base = ci * Tb

    def step(t, carry):
        h = h_scr[...]                    # (H, Bt) f32
        c = c_scr[...]
        gates = gx_scr[t] + jnp.dot(whh_ref[...], h.astype(jnp.bfloat16),
                                    preferred_element_type=jnp.float32)
        # One full-width sigmoid; g-gate rows of weights/bias were pre-scaled
        # by 2, so tanh(z) == 2*sigmoid(2z) - 1 (two cheap VPU ops).
        sig = jax.nn.sigmoid(gates)       # (4H, Bt), single EUP pass
        i_g = sig[0 * H:1 * H]
        f_g = sig[1 * H:2 * H]
        g_g = 2.0 * sig[2 * H:3 * H] - 1.0
        o_g = sig[3 * H:4 * H]
        c_new = f_g * c + i_g * g_g
        h_new = o_g * jnp.tanh(c_new)

        # Guard padded tail timesteps (T padded up to a chunk multiple).
        @pl.when(base + t < seq_len)
        def _():
            h_scr[...] = h_new
            c_scr[...] = c_new
            out_ref[t] = h_new            # lane-dense (H, Bt) store

        return carry

    lax.fori_loop(0, Tb, step, 0, unroll=min(Tb, 8))

    # Final states: constant-index output blocks; writing every chunk is cheap
    # (VMEM store) and removes any reliance on last-chunk-only writeback.
    hn_ref[...] = h_scr[...]
    cn_ref[...] = c_scr[...]


def lstm_forward(x, h0, c0, w_ih, w_hh, b_ih, b_hh, *,
                 max_chunk=128, vmem_budget_bytes=8 * 1024 * 1024):
    """Single-layer LSTM over a whole (T, B, D) sequence inside Pallas.

    Returns out (T, B, H) and (h_n, c_n) each (1, B, H).
    MXU matmuls use bf16 operands with f32 accumulation; gate math is f32.
    """
    T, B, D = x.shape
    L, Bh, H = h0.shape
    assert L == 1 and Bh == B, "only single-layer LSTM implemented"
    G = 4 * H
    f32, bf16 = jnp.float32, jnp.bfloat16

    # --- weight prep (XLA side): fold the 2x g-gate scale, fuse biases -------
    scale = jnp.ones((G, 1), f32).at[2 * H:3 * H].set(2.0)
    wih = (jnp.asarray(w_ih, f32) * scale).astype(bf16)            # (4H, D)
    whh = (jnp.asarray(w_hh, f32) * scale).astype(bf16)            # (4H, H)
    bias = (jnp.asarray(b_ih, f32) + jnp.asarray(b_hh, f32)).reshape(G, 1) * scale

    # --- batch-on-lanes layout ------------------------------------------------
    Bt = 128 if B <= 128 else 256      # lane tile; 256 fills the v6e/v7x MXU
    Bp = _round_up(B, Bt)
    nb = Bp // Bt

    # --- time chunking bounded by a VMEM budget -------------------------------
    # per-step VMEM bytes: gx (f32) + double-buffered x chunk (bf16) + out (f32)
    per_step = Bt * (16 * H + 4 * D + 8 * H)
    Tb = int(max(1, min(vmem_budget_bytes // per_step, max_chunk, T)))
    nc = -(-T // Tb)
    Tp = nc * Tb

    x = jnp.asarray(x, f32).astype(bf16)
    x = jnp.pad(x, ((0, Tp - T), (0, Bp - B), (0, 0)))             # (Tp, Bp, D)
    x_r = x.reshape(nc, Tb, nb, Bt, D).transpose(2, 0, 1, 4, 3)    # (nb,nc,Tb,D,Bt)

    h0_r = jnp.pad(jnp.asarray(h0[0], f32), ((0, Bp - B), (0, 0))).T   # (H, Bp)
    c0_r = jnp.pad(jnp.asarray(c0[0], f32), ((0, Bp - B), (0, 0))).T   # (H, Bp)

    kernel = functools.partial(_lstm_chunk_kernel, hidden_size=H, seq_len=T)

    out_r, hn_r, cn_r = pl.pallas_call(
        kernel,
        out_shape=(jax.ShapeDtypeStruct((Tp, H, Bp), f32),
                   jax.ShapeDtypeStruct((H, Bp), f32),
                   jax.ShapeDtypeStruct((H, Bp), f32)),
        grid_spec=pltpu.PrefetchScalarGridSpec(
            num_scalar_prefetch=0,
            grid=(nb, nc),                                    # (batch tiles, time chunks)
            in_specs=[
                pl.BlockSpec((None, None, Tb, D, Bt),
                             lambda bi, ci: (bi, ci, 0, 0, 0)),        # x chunk
                pl.BlockSpec((G, D), lambda bi, ci: (0, 0)),           # W_ih (scaled, bf16)
                pl.BlockSpec((G, H), lambda bi, ci: (0, 0)),           # W_hh (scaled, bf16)
                pl.BlockSpec((G, 1), lambda bi, ci: (0, 0)),           # fused bias (f32)
                pl.BlockSpec((H, Bt), lambda bi, ci: (0, bi)),         # h0 tile
                pl.BlockSpec((H, Bt), lambda bi, ci: (0, bi)),         # c0 tile
            ],
            out_specs=[
                pl.BlockSpec((Tb, H, Bt), lambda bi, ci: (ci, 0, bi)),  # out chunk
                pl.BlockSpec((H, Bt), lambda bi, ci: (0, bi)),          # h_n tile
                pl.BlockSpec((H, Bt), lambda bi, ci: (0, bi)),          # c_n tile
            ],
            scratch_shapes=[
                pltpu.VMEM((Tb, G, Bt), f32),    # staged input projection gx
                pltpu.VMEM((H, Bt), f32),        # h carry
                pltpu.VMEM((H, Bt), f32),        # c carry
            ],
        ),
        compiler_params=pltpu.CompilerParams(
            dimension_semantics=("parallel", "arbitrary"),  # batch ||, time seq
            vmem_limit_bytes=32 * 1024 * 1024),
    )(x_r, wih, whh, bias, h0_r, c0_r)

    out = out_r[:T, :, :B].transpose(0, 2, 1)     # (T, B, H)
    hn = hn_r[:, :B].T[None]                      # (1, B, H)
    cn = cn_r[:, :B].T[None]
    return out, (hn, cn)


# ----------------------------------------------------------------------------
# JAX port of the `Memory` module (LSTM, num_layers=1)
# ----------------------------------------------------------------------------
class Memory:
    def __init__(self, input_size, type="lstm", num_layers=1, hidden_size=256, key=None):
        assert type == "lstm" and num_layers == 1, "only single-layer LSTM implemented"
        self.input_size = input_size
        self.hidden_size = hidden_size
        key = jax.random.PRNGKey(0) if key is None else key
        k1, k2, k3, k4 = jax.random.split(key, 4)
        bound = 1.0 / np.sqrt(hidden_size)            # PyTorch LSTM default init
        u = lambda k, s: jax.random.uniform(k, s, jnp.float32, -bound, bound)
        self.w_ih = u(k1, (4 * hidden_size, input_size))
        self.w_hh = u(k2, (4 * hidden_size, hidden_size))
        self.b_ih = u(k3, (4 * hidden_size,))
        self.b_hh = u(k4, (4 * hidden_size,))
        self.hidden_states = None

    def forward(self, input, masks=None, hidden_states=None):
        batch_mode = masks is not None
        if batch_mode:
            if hidden_states is None:
                raise ValueError("Hidden states not passed to memory module during policy update")
            out, _ = lstm_forward(input, hidden_states[0], hidden_states[1],
                                  self.w_ih, self.w_hh, self.b_ih, self.b_hh)
            # TODO(synk): unpad_trajectories(out, masks) is gather/reshape glue not
            # defined in the provided module; returning the padded sequence output.
            return out
        else:
            # TODO(synk): a single env step (T==1) could bypass Pallas / alias the
            # h/c buffers to shave the fixed pallas_call cost; kept in-kernel here.
            x = input[None]                            # (1, B, D)
            B = x.shape[1]
            if self.hidden_states is None:
                h0 = jnp.zeros((1, B, self.hidden_size), jnp.float32)
                c0 = jnp.zeros((1, B, self.hidden_size), jnp.float32)
            else:
                h0, c0 = self.hidden_states
            out, self.hidden_states = lstm_forward(
                x, h0, c0, self.w_ih, self.w_hh, self.b_ih, self.b_hh)
            return out

    def reset(self, dones):
        assert dones is not None
        if self.hidden_states is None:
            return
        keep = jnp.logical_not(jnp.asarray(dones, bool))[None, :, None]
        h, c = self.hidden_states
        self.hidden_states = (jnp.where(keep, h, 0.0), jnp.where(keep, c, 0.0))


# ----------------------------------------------------------------------------
# Pure-JAX reference (lax.scan) matching the kernel's mixed-precision contract
# (bf16 matmul operands, f32 accumulation and f32 gate math).
# ----------------------------------------------------------------------------
def lstm_ref(x, h0, c0, w_ih, w_hh, b_ih, b_hh, matmul_dtype=jnp.bfloat16):
    H = h0.shape[-1]
    wih_t = jnp.asarray(w_ih, jnp.float32).T.astype(matmul_dtype)
    whh_t = jnp.asarray(w_hh, jnp.float32).T.astype(matmul_dtype)
    b = jnp.asarray(b_ih, jnp.float32) + jnp.asarray(b_hh, jnp.float32)

    def step(carry, xt):
        h, c = carry
        gates = (jnp.dot(xt.astype(matmul_dtype), wih_t, preferred_element_type=jnp.float32)
                 + jnp.dot(h.astype(matmul_dtype), whh_t, preferred_element_type=jnp.float32)
                 + b)
        i = jax.nn.sigmoid(gates[:, 0 * H:1 * H])
        f = jax.nn.sigmoid(gates[:, 1 * H:2 * H])
        g = jnp.tanh(gates[:, 2 * H:3 * H])
        o = jax.nn.sigmoid(gates[:, 3 * H:4 * H])
        c_new = f * c + i * g
        h_new = o * jnp.tanh(c_new)
        return (h_new, c_new), h_new

    (hT, cT), ys = lax.scan(step, (jnp.asarray(h0[0], jnp.float32),
                                   jnp.asarray(c0[0], jnp.float32)),
                            jnp.asarray(x, jnp.float32))
    return ys, (hT[None], cT[None])


if __name__ == "__main__":
    key = jax.random.PRNGKey(0)
    k_x, k_xb, k_h, k_c, k_w, k_x7 = jax.random.split(key, 6)

    input_size, hidden_size, B, T = 16, 32, 4, 8

    mem = Memory(input_size, type="lstm", num_layers=1, hidden_size=hidden_size, key=k_w)

    # --- inference path (masks is None): input (B, D) -> out (1, B, H) ---
    x_infer = jax.random.normal(k_x, (B, input_size), jnp.float32)
    out_infer = mem.forward(x_infer)
    jax.block_until_ready(out_infer)

    # --- batch-update path (masks given): input (T, B, D) + hidden states ---
    x_seq = jax.random.normal(k_xb, (T, B, input_size), jnp.float32)
    h0 = jax.random.normal(k_h, (1, B, hidden_size), jnp.float32)
    c0 = jax.random.normal(k_c, (1, B, hidden_size), jnp.float32)
    masks = jnp.ones((T, B), jnp.float32)
    out_seq = mem.forward(x_seq, masks=masks, hidden_states=(h0, c0))
    jax.block_until_ready(out_seq)

    # --- checks against the mixed-precision reference ---
    ref_infer, _ = lstm_ref(x_infer[None],
                            jnp.zeros((1, B, hidden_size), jnp.float32),
                            jnp.zeros((1, B, hidden_size), jnp.float32),
                            mem.w_ih, mem.w_hh, mem.b_ih, mem.b_hh)
    ref_seq, (ref_hn, ref_cn) = lstm_ref(x_seq, h0, c0,
                                         mem.w_ih, mem.w_hh, mem.b_ih, mem.b_hh)

    tol = dict(atol=2e-3, rtol=2e-3)
    np.testing.assert_allclose(np.asarray(out_infer), np.asarray(ref_infer), **tol)
    np.testing.assert_allclose(np.asarray(out_seq), np.asarray(ref_seq), **tol)
    np.testing.assert_allclose(np.asarray(mem.hidden_states[0]),
                               np.asarray(ref_infer[-1:]), **tol)

    # final-state outputs of the sequence path
    _, (hn_seq, cn_seq) = lstm_forward(x_seq, h0, c0,
                                       mem.w_ih, mem.w_hh, mem.b_ih, mem.b_hh)
    np.testing.assert_allclose(np.asarray(hn_seq), np.asarray(ref_hn), **tol)
    np.testing.assert_allclose(np.asarray(cn_seq), np.asarray(ref_cn), **tol)

    # ragged sequence length: forces time padding + masked tail chunk (Tb=3, T=7)
    T7 = 7
    x7 = jax.random.normal(k_x7, (T7, B, input_size), jnp.float32)
    out7, (hn7, cn7) = lstm_forward(x7, h0, c0, mem.w_ih, mem.w_hh, mem.b_ih, mem.b_hh,
                                    max_chunk=3)
    ref7, (ref7_hn, ref7_cn) = lstm_ref(x7, h0, c0,
                                        mem.w_ih, mem.w_hh, mem.b_ih, mem.b_hh)
    np.testing.assert_allclose(np.asarray(out7), np.asarray(ref7), **tol)
    np.testing.assert_allclose(np.asarray(hn7), np.asarray(ref7_hn), **tol)
    np.testing.assert_allclose(np.asarray(cn7), np.asarray(ref7_cn), **tol)

    print("KERNEL_OK")
</pallas_src>

<mosaic_0001>
module attributes {stable_mosaic.version = 11 : i64} {
  func.func @_lstm_chunk_kernel(%arg0: i32, %arg1: i32, %arg2: memref<1x1x1x16x128xbf16, #tpu.memory_space<vmem>>, %arg3: memref<128x16xbf16, #tpu.memory_space<vmem>>, %arg4: memref<128x32xbf16, #tpu.memory_space<vmem>>, %arg5: memref<128x1xf32, #tpu.memory_space<vmem>>, %arg6: memref<32x128xf32, #tpu.memory_space<vmem>>, %arg7: memref<32x128xf32, #tpu.memory_space<vmem>>, %arg8: memref<1x32x128xf32, #tpu.memory_space<vmem>>, %arg9: memref<32x128xf32, #tpu.memory_space<vmem>>, %arg10: memref<32x128xf32, #tpu.memory_space<vmem>>, %arg11: memref<1x128x128xf32, #tpu.memory_space<vmem>>, %arg12: memref<32x128xf32, #tpu.memory_space<vmem>>, %arg13: memref<32x128xf32, #tpu.memory_space<vmem>>) attributes {dimension_semantics = [#tpu.dimension_semantics<parallel>, #tpu.dimension_semantics<arbitrary>], iteration_bounds = array<i64: 1, 1>, scalar_prefetch = 0 : i64, scratch_operands = 3 : i64, tpu.core_type = #tpu.core_type<tc>, window_params = [{transform_indices = @transform_0, window_bounds = array<i64: 1, 1, 1, 16, 128>}, {pipeline_mode = #tpu.pipeline_mode<synchronous>, transform_indices = @transform_1, window_bounds = array<i64: 128, 16>}, {pipeline_mode = #tpu.pipeline_mode<synchronous>, transform_indices = @transform_2, window_bounds = array<i64: 128, 32>}, {pipeline_mode = #tpu.pipeline_mode<synchronous>, transform_indices = @transform_3, window_bounds = array<i64: 128, 1>}, {transform_indices = @transform_4, window_bounds = array<i64: 32, 128>}, {transform_indices = @transform_5, window_bounds = array<i64: 32, 128>}, {transform_indices = @transform_6, window_bounds = array<i64: 1, 32, 128>}, {transform_indices = @transform_7, window_bounds = array<i64: 32, 128>}, {transform_indices = @transform_8, window_bounds = array<i64: 32, 128>}]} {
    %c0_i32 = arith.constant 0 : i32
    %0 = arith.cmpi eq, %arg1, %c0_i32 : i32
    %1 = arith.extui %0 : i1 to i32
    %c0_i32_0 = arith.constant 0 : i32
    %2 = arith.cmpi ne, %1, %c0_i32_0 : i32
    scf.if %2 {
      %c0_36 = arith.constant 0 : index
      %c0_37 = arith.constant 0 : index
      %51 = vector.load %arg6[%c0_36, %c0_37] : memref<32x128xf32, #tpu.memory_space<vmem>>, vector<32x128xf32>
      %c0_38 = arith.constant 0 : index
      %c0_39 = arith.constant 0 : index
      %52 = vector.load %arg12[%c0_38, %c0_39] : memref<32x128xf32, #tpu.memory_space<vmem>>, vector<32x128xf32>
      tpu.vector_store %arg12[%c0_38, %c0_39], %51 {strides = array<i32>} : memref<32x128xf32, #tpu.memory_space<vmem>>, vector<32x128xf32>,
      %c0_40 = arith.constant 0 : index
      %c0_41 = arith.constant 0 : index
      %53 = vector.load %arg7[%c0_40, %c0_41] : memref<32x128xf32, #tpu.memory_space<vmem>>, vector<32x128xf32>
      %c0_42 = arith.constant 0 : index
      %c0_43 = arith.constant 0 : index
      %54 = vector.load %arg13[%c0_42, %c0_43] : memref<32x128xf32, #tpu.memory_space<vmem>>, vector<32x128xf32>
      tpu.vector_store %arg13[%c0_42, %c0_43], %53 {strides = array<i32>} : memref<32x128xf32, #tpu.memory_space<vmem>>, vector<32x128xf32>,
    } else {
    }
    %c0_i32_1 = arith.constant 0 : i32
    %c0 = arith.constant 0 : index
    %c0_2 = arith.constant 0 : index
    %3 = vector.load %arg3[%c0, %c0_2] : memref<128x16xbf16, #tpu.memory_space<vmem>>, vector<128x16xbf16>
    %c0_3 = arith.constant 0 : index
    %c0_4 = arith.constant 0 : index
    %4 = arith.index_cast %c0_i32_1 : i32 to index
    %c0_5 = arith.constant 0 : index
    %c0_6 = arith.constant 0 : index
    %5 = vector.load %arg2[%c0_3, %c0_4, %4, %c0_5, %c0_6] : memref<1x1x1x16x128xbf16, #tpu.memory_space<vmem>>, vector<1x1x1x16x128xbf16>
    %6 = vector.shape_cast %5 : vector<1x1x1x16x128xbf16> to vector<16x128xbf16>
    %cst = arith.constant dense<0.000000e+00> : vector<128x128xf32>
    %7 = tpu.matmul %3, %6, %cst {dimension_numbers = #tpu.dot_dimension_numbers<[1], [0], [0], [1], [0, 0, 1, 1], [], []>} : vector<128x16xbf16>, vector<16x128xbf16>, vector<128x128xf32> -> vector<128x128xf32>
    %c0_7 = arith.constant 0 : index
    %c0_8 = arith.constant 0 : index
    %8 = vector.load %arg5[%c0_7, %c0_8] : memref<128x1xf32, #tpu.memory_space<vmem>>, vector<128x1xf32>
    %9 = vector.broadcast %8 : vector<128x1xf32> to vector<128x128xf32>
    %10 = arith.addf %7, %9 : vector<128x128xf32>
    %11 = arith.index_cast %c0_i32_1 : i32 to index
    %c0_9 = arith.constant 0 : index
    %c0_10 = arith.constant 0 : index
    %12 = vector.load %arg11[%11, %c0_9, %c0_10] : memref<1x128x128xf32, #tpu.memory_space<vmem>>, vector<1x128x128xf32>
    %13 = vector.shape_cast %12 : vector<1x128x128xf32> to vector<128x128xf32>
    %14 = vector.shape_cast %10 : vector<128x128xf32> to vector<1x128x128xf32>
    tpu.vector_store %arg11[%11, %c0_9, %c0_10], %14 {strides = array<i32>} : memref<1x128x128xf32, #tpu.memory_space<vmem>>, vector<1x128x128xf32>,
    %c1_i32 = arith.constant 1 : i32
    %c1_i32_11 = arith.constant 1 : i32
    %15 = arith.muli %arg1, %c1_i32_11 : i32
    %c0_i32_12 = arith.constant 0 : i32
    %c0_13 = arith.constant 0 : index
    %c0_14 = arith.constant 0 : index
    %16 = vector.load %arg12[%c0_13, %c0_14] : memref<32x128xf32, #tpu.memory_space<vmem>>, vector<32x128xf32>
    %c0_15 = arith.constant 0 : index
    %c0_16 = arith.constant 0 : index
    %17 = vector.load %arg13[%c0_15, %c0_16] : memref<32x128xf32, #tpu.memory_space<vmem>>, vector<32x128xf32>
    %18 = arith.index_cast %c0_i32_12 : i32 to index
    %c0_17 = arith.constant 0 : index
    %c0_18 = arith.constant 0 : index
    %19 = vector.load %arg11[%18, %c0_17, %c0_18] : memref<1x128x128xf32, #tpu.memory_space<vmem>>, vector<1x128x128xf32>
    %20 = vector.shape_cast %19 : vector<1x128x128xf32> to vector<128x128xf32>
    %c0_19 = arith.constant 0 : index
    %c0_20 = arith.constant 0 : index
    %21 = vector.load %arg4[%c0_19, %c0_20] : memref<128x32xbf16, #tpu.memory_space<vmem>>, vector<128x32xbf16>
    %22 = arith.truncf %16 : vector<32x128xf32> to vector<32x128xbf16>
    %cst_21 = arith.constant dense<0.000000e+00> : vector<128x128xf32>
    %23 = tpu.matmul %21, %22, %cst_21 {dimension_numbers = #tpu.dot_dimension_numbers<[1], [0], [0], [1], [0, 0, 1, 1], [], []>} : vector<128x32xbf16>, vector<32x128xbf16>, vector<128x128xf32> -> vector<128x128xf32>
    %24 = arith.addf %20, %23 : vector<128x128xf32>
    %25 = arith.negf %24 : vector<128x128xf32>
    %26 = math.exp %25 : vector<128x128xf32>
    %cst_22 = arith.constant 1.000000e+00 : f32
    %27 = vector.broadcast %cst_22 : f32 to vector<128x128xf32>
    %28 = arith.addf %27, %26 : vector<128x128xf32>
    %29 = arith.divf %27, %28 : vector<128x128xf32>
    %30 = vector.extract_strided_slice %29 {offsets = [0, 0], sizes = [32, 128], strides = [1, 1]} : vector<128x128xf32> to vector<32x128xf32>
    %31 = vector.extract_strided_slice %29 {offsets = [32, 0], sizes = [32, 128], strides = [1, 1]} : vector<128x128xf32> to vector<32x128xf32>
    %32 = vector.extract_strided_slice %29 {offsets = [64, 0], sizes = [32, 128], strides = [1, 1]} : vector<128x128xf32> to vector<32x128xf32>
    %cst_23 = arith.constant 2.000000e+00 : f32
    %33 = vector.broadcast %cst_23 : f32 to vector<32x128xf32>
    %34 = arith.mulf %33, %32 : vector<32x128xf32>
    %cst_24 = arith.constant 1.000000e+00 : f32
    %35 = vector.broadcast %cst_24 : f32 to vector<32x128xf32>
    %36 = arith.subf %34, %35 : vector<32x128xf32>
    %37 = vector.extract_strided_slice %29 {offsets = [96, 0], sizes = [32, 128], strides = [1, 1]} : vector<128x128xf32> to vector<32x128xf32>
    %38 = arith.mulf %31, %17 : vector<32x128xf32>
    %39 = arith.mulf %30, %36 : vector<32x128xf32>
    %40 = arith.addf %38, %39 : vector<32x128xf32>
    %41 = math.tanh %40 : vector<32x128xf32>
    %42 = arith.mulf %37, %41 : vector<32x128xf32>
    %43 = arith.addi %15, %c0_i32_12 : i32
    %c1_i32_25 = arith.constant 1 : i32
    %44 = arith.cmpi slt, %43, %c1_i32_25 : i32
    %45 = arith.extui %44 : i1 to i32
    %c0_i32_26 = arith.constant 0 : i32
    %46 = arith.cmpi ne, %45, %c0_i32_26 : i32
    scf.if %46 {
      %c0_36 = arith.constant 0 : index
      %c0_37 = arith.constant 0 : index
      %51 = vector.load %arg12[%c0_36, %c0_37] : memref<32x128xf32, #tpu.memory_space<vmem>>, vector<32x128xf32>
      tpu.vector_store %arg12[%c0_36, %c0_37], %42 {strides = array<i32>} : memref<32x128xf32, #tpu.memory_space<vmem>>, vector<32x128xf32>,
      %c0_38 = arith.constant 0 : index
      %c0_39 = arith.constant 0 : index
      %52 = vector.load %arg13[%c0_38, %c0_39] : memref<32x128xf32, #tpu.memory_space<vmem>>, vector<32x128xf32>
      tpu.vector_store %arg13[%c0_38, %c0_39], %40 {strides = array<i32>} : memref<32x128xf32, #tpu.memory_space<vmem>>, vector<32x128xf32>,
      %53 = arith.index_cast %c0_i32_12 : i32 to index
      %c0_40 = arith.constant 0 : index
      %c0_41 = arith.constant 0 : index
      %54 = vector.load %arg8[%53, %c0_40, %c0_41] : memref<1x32x128xf32, #tpu.memory_space<vmem>>, vector<1x32x128xf32>
      %55 = vector.shape_cast %54 : vector<1x32x128xf32> to vector<32x128xf32>
      %56 = vector.shape_cast %42 : vector<32x128xf32> to vector<1x32x128xf32>
      tpu.vector_store %arg8[%53, %c0_40, %c0_41], %56 {strides = array<i32>} : memref<1x32x128xf32, #tpu.memory_space<vmem>>, vector<1x32x128xf32>,
    } else {
    }
    %c1_i32_27 = arith.constant 1 : i32
    %c0_28 = arith.constant 0 : index
    %c0_29 = arith.constant 0 : index
    %47 = vector.load %arg12[%c0_28, %c0_29] : memref<32x128xf32, #tpu.memory_space<vmem>>, vector<32x128xf32>
    %c0_30 = arith.constant 0 : index
    %c0_31 = arith.constant 0 : index
    %48 = vector.load %arg9[%c0_30, %c0_31] : memref<32x128xf32, #tpu.memory_space<vmem>>, vector<32x128xf32>
    tpu.vector_store %arg9[%c0_30, %c0_31], %47 {strides = array<i32>} : memref<32x128xf32, #tpu.memory_space<vmem>>, vector<32x128xf32>,
    %c0_32 = arith.constant 0 : index
    %c0_33 = arith.constant 0 : index
    %49 = vector.load %arg13[%c0_32, %c0_33] : memref<32x128xf32, #tpu.memory_space<vmem>>, vector<32x128xf32>
    %c0_34 = arith.constant 0 : index
    %c0_35 = arith.constant 0 : index
    %50 = vector.load %arg10[%c0_34, %c0_35] : memref<32x128xf32, #tpu.memory_space<vmem>>, vector<32x128xf32>
    tpu.vector_store %arg10[%c0_34, %c0_35], %49 {strides = array<i32>} : memref<32x128xf32, #tpu.memory_space<vmem>>, vector<32x128xf32>,
    return
  }
  func.func @transform_0(%arg0: i32, %arg1: i32) -> (i32, i32, i32, i32, i32) {
    %c0_i32 = arith.constant 0 : i32
    %c0_i32_0 = arith.constant 0 : i32
    %c0_i32_1 = arith.constant 0 : i32
    %c0_i32_2 = arith.constant 0 : i32
    return %arg0, %arg1, %c0_i32, %c0_i32_0, %c0_i32_1 : i32, i32, i32, i32, i32
  }
  func.func @transform_1(%arg0: i32, %arg1: i32) -> (i32, i32) {
    %c0_i32 = arith.constant 0 : i32
    %c0_i32_0 = arith.constant 0 : i32
    %c0_i32_1 = arith.constant 0 : i32
    return %c0_i32, %c0_i32_0 : i32, i32
  }
  func.func @transform_2(%arg0: i32, %arg1: i32) -> (i32, i32) {
    %c0_i32 = arith.constant 0 : i32
    %c0_i32_0 = arith.constant 0 : i32
    %c0_i32_1 = arith.constant 0 : i32
    return %c0_i32, %c0_i32_0 : i32, i32
  }
  func.func @transform_3(%arg0: i32, %arg1: i32) -> (i32, i32) {
    %c0_i32 = arith.constant 0 : i32
    %c0_i32_0 = arith.constant 0 : i32
    %c0_i32_1 = arith.constant 0 : i32
    return %c0_i32, %c0_i32_0 : i32, i32
  }
  func.func @transform_4(%arg0: i32, %arg1: i32) -> (i32, i32) {
    %c0_i32 = arith.constant 0 : i32
    %c0_i32_0 = arith.constant 0 : i32
    return %c0_i32, %arg0 : i32, i32
  }
  func.func @transform_5(%arg0: i32, %arg1: i32) -> (i32, i32) {
    %c0_i32 = arith.constant 0 : i32
    %c0_i32_0 = arith.constant 0 : i32
    return %c0_i32, %arg0 : i32, i32
  }
  func.func @transform_6(%arg0: i32, %arg1: i32) -> (i32, i32, i32) {
    %c0_i32 = arith.constant 0 : i32
    %c0_i32_0 = arith.constant 0 : i32
    return %arg1, %c0_i32, %arg0 : i32, i32, i32
  }
  func.func @transform_7(%arg0: i32, %arg1: i32) -> (i32, i32) {
    %c0_i32 = arith.constant 0 : i32
    %c0_i32_0 = arith.constant 0 : i32
    return %c0_i32, %arg0 : i32, i32
  }
  func.func @transform_8(%arg0: i32, %arg1: i32) -> (i32, i32) {
    %c0_i32 = arith.constant 0 : i32
    %c0_i32_0 = arith.constant 0 : i32
    return %c0_i32, %arg0 : i32, i32
  }
}

</mosaic_0001>

<llo_original>
// kernel: tpu_custom_call.1
$region0: #{tpu_custom_call.1}
  #allocation0 [shape = 'u32[]', space=smem, size = 0x4, offset = 0x4, fixed_abs, tag = 'smem constant byte address 0x4 - core index']
  #allocation1 [shape = 'u32[72,128]{1,0:T(1,128)}', space=vmem, size = 0x9000, scoped, tag = 'internal scratch']
  #allocation2 [shape = 'f32[1,128,128]{2,1,0:T(8,128)}', space=vmem, size = 0x10000, scoped, tag = 'scratch operand']
  #allocation3 [shape = 'f32[32,128]{1,0:T(8,128)}', space=vmem, size = 0x4000, scoped, tag = 'scratch operand']
  #allocation4 [shape = 'f32[32,128]{1,0:T(8,128)}', space=vmem, size = 0x4000, scoped, tag = 'scratch operand']
  %s0 = inlined_call_operand.vmem [shape: bf16[1,1,1,16,128], index: 0, kind: input, shape index: {}]
  %s1 = inlined_call_operand.vmem [shape: bf16[128,16], index: 1, kind: input, shape index: {}]
  %s2 = inlined_call_operand.vmem [shape: bf16[128,32], index: 2, kind: input, shape index: {}]
  %s3 = inlined_call_operand.vmem [shape: f32[128,1], index: 3, kind: input, shape index: {}]
  %s4 = inlined_call_operand.vmem [shape: f32[32,128], index: 4, kind: input, shape index: {}]
  %s5 = inlined_call_operand.vmem [shape: f32[32,128], index: 5, kind: input, shape index: {}]
  %s6 = inlined_call_operand.hbm [shape: f32[1,32,128], index: 6, kind: output, shape index: {0}]
  %s7 = inlined_call_operand.hbm [shape: f32[32,128], index: 7, kind: output, shape index: {1}]
  %s8 = inlined_call_operand.hbm [shape: f32[32,128], index: 8, kind: output, shape index: {2}]
  %9 = xla_tuple %s6, %s7, %s8
  %s10 = sld [smem:[#allocation0]]
  $region58: #{tpu_custom_call.1} parent=0
    _
  %s12 = ssub.s32 1, %s10
  %s13 = scalar_select 0, %s12, %s10
  $region1: #{tpu_custom_call.1} parent=0
    #allocation5 [shape = 'u8[16384]{0}', space=vmem, size = 0x4000, scoped, tag = 'output window, operand 0, single buffered']
    #allocation6 [shape = 's32[1]{0}', space=sflag, size = 0x4, scoped, tag = 'scoped memory for tpu_custom_call.1']
    #allocation7 [shape = 'u8[16384]{0}', space=vmem, size = 0x4000, scoped, tag = 'output window, operand 1, single buffered']
    #allocation8 [shape = 's32[1]{0}', space=sflag, size = 0x4, scoped, tag = 'scoped memory for tpu_custom_call.1']
    #allocation9 [shape = 'u8[16384]{0}', space=vmem, size = 0x4000, scoped, tag = 'output window, operand 2, single buffered']
    %14 = vsyncpa [#allocation6], 0
    %15 = vsyncpa [#allocation8], 0
    // Predicated region
    $region2: #{tpu_custom_call.1} parent=1 // pred_check
      _
    $region3: #{tpu_custom_call.1} parent=1 // pred_check_branch
      %17 = sbr.rel (0) target = $region5
    $region4: #{tpu_custom_call.1} parent=1 // pred_region
      _
    $region5: #{tpu_custom_call.1} parent=1 // pred_fallthru
      _
    // Predicated region
    $region6: #{tpu_custom_call.1} parent=1 // pred_check
      _
    $region7: #{tpu_custom_call.1} parent=1 // pred_check_branch
      %19 = sbr.rel (0) target = $region9
    $region8: #{tpu_custom_call.1} parent=1 // pred_region
      _
    $region9: #{tpu_custom_call.1} parent=1 // pred_fallthru
      _
    // Predicated region
    $region10: #{tpu_custom_call.1} parent=1 // pred_check
      _
    $region11: #{tpu_custom_call.1} parent=1 // pred_check_branch
      %21 = sbr.rel (0) target = $region13
    $region12: #{tpu_custom_call.1} parent=1 // pred_region
      _
    $region13: #{tpu_custom_call.1} parent=1 // pred_fallthru
      _
    // Predicated region
    $region14: #{tpu_custom_call.1} parent=1 // pred_check
      _
    $region15: #{tpu_custom_call.1} parent=1 // pred_check_branch
      %23 = sbr.rel (0) target = $region17
    $region16: #{tpu_custom_call.1} parent=1 // pred_region
      _
    $region17: #{tpu_custom_call.1} parent=1 // pred_fallthru
      _
    // Predicated region
    $region18: #{tpu_custom_call.1} parent=1 // pred_check
      _
    $region19: #{tpu_custom_call.1} parent=1 // pred_check_branch
      %25 = sbr.rel (0) target = $region21
    $region20: #{tpu_custom_call.1} parent=1 // pred_region
      _
    $region21: #{tpu_custom_call.1} parent=1 // pred_fallthru
      _
    // Predicated region
    $region22: #{tpu_custom_call.1} parent=1 // pred_check
      _
    $region23: #{tpu_custom_call.1} parent=1 // pred_check_branch
      %27 = sbr.rel (0) target = $region25
    $region24: #{tpu_custom_call.1} parent=1 // pred_region
      _
    $region25: #{tpu_custom_call.1} parent=1 // pred_fallthru
      _
    %p29 = scmp.eq.s32.totalorder 0, 0
    // Predicated region
    $region26: #{tpu_custom_call.1} parent=1 // pred_check
      %p30 = pneg %p29
    $region27: #{tpu_custom_call.1} parent=1 // pred_check_branch
      %32 = sbr.rel (%p30) target = $region29
    $region28: #{tpu_custom_call.1} parent=1 // pred_region
      %v33 = vld [vmem:[%s4] sm:$0xff]
      %v34 = vld [vmem:[%s4 + $0x8] sm:$0xff]
      %v35 = vld [vmem:[%s4 + $0x10] sm:$0xff]
      %v36 = vld [vmem:[%s4 + $0x18] sm:$0xff]
      %37 = vst [vmem:[#allocation3] sm:$0xff] %v33
      %38 = vst [vmem:[#allocation3 + $0x8] sm:$0xff] %v34
      %39 = vst [vmem:[#allocation3 + $0x10] sm:$0xff] %v35
      %40 = vst [vmem:[#allocation3 + $0x18] sm:$0xff] %v36
      %v41 = vld [vmem:[%s5] sm:$0xff]
      %v42 = vld [vmem:[%s5 + $0x8] sm:$0xff]
      %v43 = vld [vmem:[%s5 + $0x10] sm:$0xff]
      %v44 = vld [vmem:[%s5 + $0x18] sm:$0xff]
      %45 = vst [vmem:[#allocation4] sm:$0xff] %v41
      %46 = vst [vmem:[#allocation4 + $0x8] sm:$0xff] %v42
      %47 = vst [vmem:[#allocation4 + $0x10] sm:$0xff] %v43
      %48 = vst [vmem:[#allocation4 + $0x18] sm:$0xff] %v44
    $region29: #{tpu_custom_call.1} parent=1 // pred_fallthru
      _
    %v49 = vld [vmem:[%s1] sm:$0xf]
    %v50 = vld [vmem:[%s1 + $0x4] sm:$0xf]
    %v51 = vld [vmem:[%s1 + $0x8] sm:$0xf]
    %v52 = vld [vmem:[%s1 + $0xc] sm:$0xf]
    %v53 = vld [vmem:[%s1 + $0x10] sm:$0xf]
    %v54 = vld [vmem:[%s1 + $0x14] sm:$0xf]
    %v55 = vld [vmem:[%s1 + $0x18] sm:$0xf]
    %v56 = vld [vmem:[%s1 + $0x1c] sm:$0xf]
    %v57 = vld [vmem:[%s1 + $0x20] sm:$0xf]
    %v58 = vld [vmem:[%s1 + $0x24] sm:$0xf]
    %v59 = vld [vmem:[%s1 + $0x28] sm:$0xf]
    %v60 = vld [vmem:[%s1 + $0x2c] sm:$0xf]
    %v61 = vld [vmem:[%s1 + $0x30] sm:$0xf]
    %v62 = vld [vmem:[%s1 + $0x34] sm:$0xf]
    %v63 = vld [vmem:[%s1 + $0x38] sm:$0xf]
    %v64 = vld [vmem:[%s1 + $0x3c] sm:$0xf]
    %v65 = vld [vmem:[%s0] sm:$0xf]
    %v66 = vld [vmem:[%s0 + $0x4] sm:$0xf]
    %v67 = vld [vmem:[%s3] sm:$0xff]
    %v68 = vld [vmem:[%s3 + $0x8] sm:$0xff]
    %v69 = vld [vmem:[%s3 + $0x10] sm:$0xff]
    %v70 = vld [vmem:[%s3 + $0x18] sm:$0xff]
    %v71 = vld [vmem:[%s3 + $0x20] sm:$0xff]
    %v72 = vld [vmem:[%s3 + $0x28] sm:$0xff]
    %v73 = vld [vmem:[%s3 + $0x30] sm:$0xff]
    %v74 = vld [vmem:[%s3 + $0x38] sm:$0xff]
    %v75 = vld [vmem:[%s3 + $0x40] sm:$0xff]
    %v76 = vld [vmem:[%s3 + $0x48] sm:$0xff]
    %v77 = vld [vmem:[%s3 + $0x50] sm:$0xff]
    %v78 = vld [vmem:[%s3 + $0x58] sm:$0xff]
    %v79 = vld [vmem:[%s3 + $0x60] sm:$0xff]
    %v80 = vld [vmem:[%s3 + $0x68] sm:$0xff]
    %v81 = vld [vmem:[%s3 + $0x70] sm:$0xff]
    %v82 = vld [vmem:[%s3 + $0x78] sm:$0xff]
    %84 = vset.pattern.permute.xlu0 0
    %85 = vperm.xlu0 %84, %v67
    %v86 = vpop.permute.xlu0 %85
    %89 = vset.pattern.permute.xlu0 0
    %90 = vperm.xlu0 %89, %v68
    %v91 = vpop.permute.xlu0 %90
    %94 = vset.pattern.permute.xlu0 0
    %95 = vperm.xlu0 %94, %v69
    %v96 = vpop.permute.xlu0 %95
    %99 = vset.pattern.permute.xlu0 0
    %100 = vperm.xlu0 %99, %v70
    %v101 = vpop.permute.xlu0 %100
    %104 = vset.pattern.permute.xlu0 0
    %105 = vperm.xlu0 %104, %v71
    %v106 = vpop.permute.xlu0 %105
    %109 = vset.pattern.permute.xlu0 0
    %110 = vperm.xlu0 %109, %v72
    %v111 = vpop.permute.xlu0 %110
    %114 = vset.pattern.permute.xlu0 0
    %115 = vperm.xlu0 %114, %v73
    %v116 = vpop.permute.xlu0 %115
    %119 = vset.pattern.permute.xlu0 0
    %120 = vperm.xlu0 %119, %v74
    %v121 = vpop.permute.xlu0 %120
    %124 = vset.pattern.permute.xlu0 0
    %125 = vperm.xlu0 %124, %v75
    %v126 = vpop.permute.xlu0 %125
    %129 = vset.pattern.permute.xlu0 0
    %130 = vperm.xlu0 %129, %v76
    %v131 = vpop.permute.xlu0 %130
    %134 = vset.pattern.permute.xlu0 0
    %135 = vperm.xlu0 %134, %v77
    %v136 = vpop.permute.xlu0 %135
    %139 = vset.pattern.permute.xlu0 0
    %140 = vperm.xlu0 %139, %v78
    %v141 = vpop.permute.xlu0 %140
    %144 = vset.pattern.permute.xlu0 0
    %145 = vperm.xlu0 %144, %v79
    %v146 = vpop.permute.xlu0 %145
    %149 = vset.pattern.permute.xlu0 0
    %150 = vperm.xlu0 %149, %v80
    %v151 = vpop.permute.xlu0 %150
    %154 = vset.pattern.permute.xlu0 0
    %155 = vperm.xlu0 %154, %v81
    %v156 = vpop.permute.xlu0 %155
    %159 = vset.pattern.permute.xlu0 0
    %160 = vperm.xlu0 %159, %v82
    %v161 = vpop.permute.xlu0 %160
    %v179 = vunpack.c.l.b16 %v49
    %v180 = vunpack.c.l.b16 %v50
    %v181 = vunpack.c.l.b16 %v51
    %v182 = vunpack.c.l.b16 %v52
    %v183 = vunpack.c.l.b16 %v53
    %v184 = vunpack.c.l.b16 %v54
    %v185 = vunpack.c.l.b16 %v55
    %v186 = vunpack.c.l.b16 %v56
    %v187 = vunpack.c.l.b16 %v57
    %v188 = vunpack.c.l.b16 %v58
    %v189 = vunpack.c.l.b16 %v59
    %v190 = vunpack.c.l.b16 %v60
    %v191 = vunpack.c.l.b16 %v61
    %v192 = vunpack.c.l.b16 %v62
    %v193 = vunpack.c.l.b16 %v63
    %v194 = vunpack.c.l.b16 %v64
    %v195 = vpack.c.b16 %v180, %v179
    %v196 = vpack.c.b16 %v182, %v181
    %v197 = vpack.c.b16 %v184, %v183
    %v198 = vpack.c.b16 %v186, %v185
    %v199 = vpack.c.b16 %v188, %v187
    %v200 = vpack.c.b16 %v190, %v189
    %v201 = vpack.c.b16 %v192, %v191
    %v202 = vpack.c.b16 %v194, %v193
    %v205 = vunpack.c.l.b16 %v65
    %v206 = vunpack.c.l.b16 %v66
    %v207 = vpack.c.b16 %v206, %v205
    %vm209 = vcmask 130048
    %v211 = vsel %vm209, %v195, 0
    %v214 = vsel %vm209, %v196, 0
    %v217 = vsel %vm209, %v197, 0
    %v220 = vsel %vm209, %v198, 0
    %v223 = vsel %vm209, %v199, 0
    %v226 = vsel %vm209, %v200, 0
    %v229 = vsel %vm209, %v201, 0
    %v232 = vsel %vm209, %v202, 0
    %234 = vmatpush.bf16.msra.mxu0 0
    %235 = vmatpush.bf16.msra.mxu0 0
    %236 = vmatpush.bf16.msra.mxu0 0
    %237 = vmatpush.bf16.msra.mxu0 0
    %238 = vmatpush.bf16.msra.mxu0 0
    %239 = vmatpush.bf16.msra.mxu0 0
    %240 = vmatpush.bf16.msra.mxu0 0
    %241 = vmatpush.bf16.msra.mxu0 %v207
    %242 = vmatmul.bf16.gmra.mxu0 %v211
    %v243 = vpop.f32.mrf.mxu0
    %v244 = vadd.f32 %v86, %v243
    %v245 = vpop.f32.mrf.mxu0
    %v246 = vadd.f32 %v91, %v245
    %247 = vmatmul.bf16.gmra.mxu0 %v214
    %v248 = vpop.f32.mrf.mxu0
    %v249 = vadd.f32 %v96, %v248
    %v250 = vpop.f32.mrf.mxu0
    %v251 = vadd.f32 %v101, %v250
    %252 = vmatmul.bf16.gmra.mxu0 %v217
    %v253 = vpop.f32.mrf.mxu0
    %v254 = vadd.f32 %v106, %v253
    %v255 = vpop.f32.mrf.mxu0
    %v256 = vadd.f32 %v111, %v255
    %257 = vmatmul.bf16.gmra.mxu0 %v220
    %v258 = vpop.f32.mrf.mxu0
    %v259 = vadd.f32 %v116, %v258
    %v260 = vpop.f32.mrf.mxu0
    %v261 = vadd.f32 %v121, %v260
    %262 = vmatmul.bf16.gmra.mxu0 %v223
    %v263 = vpop.f32.mrf.mxu0
    %v264 = vadd.f32 %v126, %v263
    %v265 = vpop.f32.mrf.mxu0
    %v266 = vadd.f32 %v131, %v265
    %267 = vmatmul.bf16.gmra.mxu0 %v226
    %v268 = vpop.f32.mrf.mxu0
    %v269 = vadd.f32 %v136, %v268
    %v270 = vpop.f32.mrf.mxu0
    %v271 = vadd.f32 %v141, %v270
    %272 = vmatmul.bf16.gmra.mxu0 %v229
    %v273 = vpop.f32.mrf.mxu0
    %v274 = vadd.f32 %v146, %v273
    %v275 = vpop.f32.mrf.mxu0
    %v276 = vadd.f32 %v151, %v275
    %277 = vmatmul.bf16.gmra.mxu0 %v232
    %v278 = vpop.f32.mrf.mxu0
    %v279 = vadd.f32 %v156, %v278
    %v280 = vpop.f32.mrf.mxu0
    %v281 = vadd.f32 %v161, %v280
    %282 = vdwg.mxu0
    %283 = vst [vmem:[#allocation2] sm:$0xff] %v244
    %284 = vst [vmem:[#allocation2 + $0x8] sm:$0xff] %v246
    %285 = vst [vmem:[#allocation2 + $0x10] sm:$0xff] %v249
    %286 = vst [vmem:[#allocation2 + $0x18] sm:$0xff] %v251
    %287 = vst [vmem:[#allocation2 + $0x20] sm:$0xff] %v254
    %288 = vst [vmem:[#allocation2 + $0x28] sm:$0xff] %v256
    %289 = vst [vmem:[#allocation2 + $0x30] sm:$0xff] %v259
    %290 = vst [vmem:[#allocation2 + $0x38] sm:$0xff] %v261
    %291 = vst [vmem:[#allocation2 + $0x40] sm:$0xff] %v264
    %292 = vst [vmem:[#allocation2 + $0x48] sm:$0xff] %v266
    %293 = vst [vmem:[#allocation2 + $0x50] sm:$0xff] %v269
    %294 = vst [vmem:[#allocation2 + $0x58] sm:$0xff] %v271
    %295 = vst [vmem:[#allocation2 + $0x60] sm:$0xff] %v274
    %296 = vst [vmem:[#allocation2 + $0x68] sm:$0xff] %v276
    %297 = vst [vmem:[#allocation2 + $0x70] sm:$0xff] %v279
    %298 = vst [vmem:[#allocation2 + $0x78] sm:$0xff] %v281
    %v299 = vld [vmem:[#allocation3] sm:$0xff]
    %v300 = vld [vmem:[#allocation3 + $0x8] sm:$0xff]
    %v301 = vld [vmem:[#allocation3 + $0x10] sm:$0xff]
    %v302 = vld [vmem:[#allocation3 + $0x18] sm:$0xff]
    %v303 = vld [vmem:[#allocation4] sm:$0xff]
    %v304 = vld [vmem:[#allocation4 + $0x8] sm:$0xff]
    %v305 = vld [vmem:[#allocation4 + $0x10] sm:$0xff]
    %v306 = vld [vmem:[#allocation4 + $0x18] sm:$0xff]
    %v307 = vld [vmem:[#allocation2] sm:$0xff]
    %v308 = vld [vmem:[#allocation2 + $0x8] sm:$0xff]
    %v309 = vld [vmem:[#allocation2 + $0x10] sm:$0xff]
    %v310 = vld [vmem:[#allocation2 + $0x18] sm:$0xff]
    %v311 = vld [vmem:[#allocation2 + $0x20] sm:$0xff]
    %v312 = vld [vmem:[#allocation2 + $0x28] sm:$0xff]
    %v313 = vld [vmem:[#allocation2 + $0x30] sm:$0xff]
    %v314 = vld [vmem:[#allocation2 + $0x38] sm:$0xff]
    %v315 = vld [vmem:[#allocation2 + $0x40] sm:$0xff]
    %v316 = vld [vmem:[#allocation2 + $0x48] sm:$0xff]
    %v317 = vld [vmem:[#allocation2 + $0x50] sm:$0xff]
    %v318 = vld [vmem:[#allocation2 + $0x58] sm:$0xff]
    %v319 = vld [vmem:[#allocation2 + $0x60] sm:$0xff]
    %v320 = vld [vmem:[#allocation2 + $0x68] sm:$0xff]
    %v321 = vld [vmem:[#allocation2 + $0x70] sm:$0xff]
    %v322 = vld [vmem:[#allocation2 + $0x78] sm:$0xff]
    %v323 = vld [vmem:[%s2] sm:$0xf]
    %v324 = vld [vmem:[%s2 + $0x4] sm:$0xf]
    %v325 = vld [vmem:[%s2 + $0x8] sm:$0xf]
    %v326 = vld [vmem:[%s2 + $0xc] sm:$0xf]
    %v327 = vld [vmem:[%s2 + $0x10] sm:$0xf]
    %v328 = vld [vmem:[%s2 + $0x14] sm:$0xf]
    %v329 = vld [vmem:[%s2 + $0x18] sm:$0xf]
    %v330 = vld [vmem:[%s2 + $0x1c] sm:$0xf]
    %v331 = vld [vmem:[%s2 + $0x20] sm:$0xf]
    %v332 = vld [vmem:[%s2 + $0x24] sm:$0xf]
    %v333 = vld [vmem:[%s2 + $0x28] sm:$0xf]
    %v334 = vld [vmem:[%s2 + $0x2c] sm:$0xf]
    %v335 = vld [vmem:[%s2 + $0x30] sm:$0xf]
    %v336 = vld [vmem:[%s2 + $0x34] sm:$0xf]
    %v337 = vld [vmem:[%s2 + $0x38] sm:$0xf]
    %v338 = vld [vmem:[%s2 + $0x3c] sm:$0xf]
    %v339 = vpack.c.bf16 %v300, %v299
    %v340 = vpack.c.bf16 %v302, %v301
    %v357 = vunpack.c.l.b16 %v323
    %v358 = vunpack.c.l.b16 %v324
    %v359 = vunpack.c.l.b16 %v325
    %v360 = vunpack.c.l.b16 %v326
    %v361 = vunpack.c.l.b16 %v327
    %v362 = vunpack.c.l.b16 %v328
    %v363 = vunpack.c.l.b16 %v329
    %v364 = vunpack.c.l.b16 %v330
    %v365 = vunpack.c.l.b16 %v331
    %v366 = vunpack.c.l.b16 %v332
    %v367 = vunpack.c.l.b16 %v333
    %v368 = vunpack.c.l.b16 %v334
    %v369 = vunpack.c.l.b16 %v335
    %v370 = vunpack.c.l.b16 %v336
    %v371 = vunpack.c.l.b16 %v337
    %v372 = vunpack.c.l.b16 %v338
    %v373 = vpack.c.b16 %v358, %v357
    %v374 = vpack.c.b16 %v360, %v359
    %v375 = vpack.c.b16 %v362, %v361
    %v376 = vpack.c.b16 %v364, %v363
    %v377 = vpack.c.b16 %v366, %v365
    %v378 = vpack.c.b16 %v368, %v367
    %v379 = vpack.c.b16 %v370, %v369
    %v380 = vpack.c.b16 %v372, %v371
    %vm381 = vcmask 261120
    %v383 = vsel %vm381, %v373, 0
    %v386 = vsel %vm381, %v374, 0
    %v389 = vsel %vm381, %v375, 0
    %v392 = vsel %vm381, %v376, 0
    %v395 = vsel %vm381, %v377, 0
    %v398 = vsel %vm381, %v378, 0
    %v401 = vsel %vm381, %v379, 0
    %v404 = vsel %vm381, %v380, 0
    %406 = vmatpush.bf16.msra.mxu0 0
    %407 = vmatpush.bf16.msra.mxu0 0
    %408 = vmatpush.bf16.msra.mxu0 0
    %409 = vmatpush.bf16.msra.mxu0 0
    %410 = vmatpush.bf16.msra.mxu0 0
    %411 = vmatpush.bf16.msra.mxu0 0
    %412 = vmatpush.bf16.msra.mxu0 %v340
    %413 = vmatpush.bf16.msra.mxu0 %v339
    %414 = vmatmul.bf16.gmra.mxu0 %v383
    %v415 = vpop.f32.mrf.mxu0
    %v416 = vadd.f32 0.0, %v415
    %v417 = vpop.f32.mrf.mxu0
    %v418 = vadd.f32 0.0, %v417
    %419 = vmatmul.bf16.gmra.mxu0 %v386
    %v420 = vpop.f32.mrf.mxu0
    %v421 = vadd.f32 0.0, %v420
    %v422 = vpop.f32.mrf.mxu0
    %v423 = vadd.f32 0.0, %v422
    %424 = vmatmul.bf16.gmra.mxu0 %v389
    %v425 = vpop.f32.mrf.mxu0
    %v426 = vadd.f32 0.0, %v425
    %v427 = vpop.f32.mrf.mxu0
    %v428 = vadd.f32 0.0, %v427
    %429 = vmatmul.bf16.gmra.mxu0 %v392
    %v430 = vpop.f32.mrf.mxu0
    %v431 = vadd.f32 0.0, %v430
    %v432 = vpop.f32.mrf.mxu0
    %v433 = vadd.f32 0.0, %v432
    %434 = vmatmul.bf16.gmra.mxu0 %v395
    %v435 = vpop.f32.mrf.mxu0
    %v436 = vadd.f32 0.0, %v435
    %v437 = vpop.f32.mrf.mxu0
    %v438 = vadd.f32 0.0, %v437
    %439 = vmatmul.bf16.gmra.mxu0 %v398
    %v440 = vpop.f32.mrf.mxu0
    %v441 = vadd.f32 0.0, %v440
    %v442 = vpop.f32.mrf.mxu0
    %v443 = vadd.f32 0.0, %v442
    %444 = vmatmul.bf16.gmra.mxu0 %v401
    %v445 = vpop.f32.mrf.mxu0
    %v446 = vadd.f32 0.0, %v445
    %v447 = vpop.f32.mrf.mxu0
    %v448 = vadd.f32 0.0, %v447
    %449 = vmatmul.bf16.gmra.mxu0 %v404
    %v450 = vpop.f32.mrf.mxu0
    %v451 = vadd.f32 0.0, %v450
    %v452 = vpop.f32.mrf.mxu0
    %v453 = vadd.f32 0.0, %v452
    %454 = vdwg.mxu0
    %v455 = vadd.f32 %v307, %v416
    %v456 = vadd.f32 %v308, %v418
    %v457 = vadd.f32 %v309, %v421
    %v458 = vadd.f32 %v310, %v423
    %v459 = vadd.f32 %v311, %v426
    %v460 = vadd.f32 %v312, %v428
    %v461 = vadd.f32 %v313, %v431
    %v462 = vadd.f32 %v314, %v433
    %v463 = vadd.f32 %v315, %v436
    %v464 = vadd.f32 %v316, %v438
    %v465 = vadd.f32 %v317, %v441
    %v466 = vadd.f32 %v318, %v443
    %v467 = vadd.f32 %v319, %v446
    %v468 = vadd.f32 %v320, %v448
    %v469 = vadd.f32 %v321, %v451
    %v470 = vadd.f32 %v322, %v453
    %v471 = vxor.u32 %v455, 2147483648
    %v472 = vxor.u32 %v456, 2147483648
    %v473 = vxor.u32 %v457, 2147483648
    %v474 = vxor.u32 %v458, 2147483648
    %v475 = vxor.u32 %v459, 2147483648
    %v476 = vxor.u32 %v460, 2147483648
    %v477 = vxor.u32 %v461, 2147483648
    %v478 = vxor.u32 %v462, 2147483648
    %v479 = vxor.u32 %v463, 2147483648
    %v480 = vxor.u32 %v464, 2147483648
    %v481 = vxor.u32 %v465, 2147483648
    %v482 = vxor.u32 %v466, 2147483648
    %v483 = vxor.u32 %v467, 2147483648
    %v484 = vxor.u32 %v468, 2147483648
    %v485 = vxor.u32 %v469, 2147483648
    %v486 = vxor.u32 %v470, 2147483648
    %v487 = vmul.f32 %v471, 1.442695
    %v488 = vpow.pop %v487
    %v489 = vmul.f32 %v472, 1.442695
    %v490 = vpow.pop %v489
    %v491 = vmul.f32 %v473, 1.442695
    %v492 = vpow.pop %v491
    %v493 = vmul.f32 %v474, 1.442695
    %v494 = vpow.pop %v493
    %v495 = vmul.f32 %v475, 1.442695
    %v496 = vpow.pop %v495
    %v497 = vmul.f32 %v476, 1.442695
    %v498 = vpow.pop %v497
    %v499 = vmul.f32 %v477, 1.442695
    %v500 = vpow.pop %v499
    %v501 = vmul.f32 %v478, 1.442695
    %v502 = vpow.pop %v501
    %v503 = vmul.f32 %v479, 1.442695
    %v504 = vpow.pop %v503
    %v505 = vmul.f32 %v480, 1.442695
    %v506 = vpow.pop %v505
    %v507 = vmul.f32 %v481, 1.442695
    %v508 = vpow.pop %v507
    %v509 = vmul.f32 %v482, 1.442695
    %v510 = vpow.pop %v509
    %v511 = vmul.f32 %v483, 1.442695
    %v512 = vpow.pop %v511
    %v513 = vmul.f32 %v484, 1.442695
    %v514 = vpow.pop %v513
    %v515 = vmul.f32 %v485, 1.442695
    %v516 = vpow.pop %v515
    %v517 = vmul.f32 %v486, 1.442695
    %v518 = vpow.pop %v517
    %v519 = vadd.f32 %v488, 1.0
    %v520 = vadd.f32 %v490, 1.0
    %v521 = vadd.f32 %v492, 1.0
    %v522 = vadd.f32 %v494, 1.0
    %v523 = vadd.f32 %v496, 1.0
    %v524 = vadd.f32 %v498, 1.0
    %v525 = vadd.f32 %v500, 1.0
    %v526 = vadd.f32 %v502, 1.0
    %v527 = vadd.f32 %v504, 1.0
    %v528 = vadd.f32 %v506, 1.0
    %v529 = vadd.f32 %v508, 1.0
    %v530 = vadd.f32 %v510, 1.0
    %v531 = vadd.f32 %v512, 1.0
    %v532 = vadd.f32 %v514, 1.0
    %v533 = vadd.f32 %v516, 1.0
    %v534 = vadd.f32 %v518, 1.0
    %v535 = vrcp.pop %v519
    %v536 = vmul.f32 %v519, %v535
    %v537 = vsub.f32 1.0, %v536
    %v538 = vmul.f32 %v535, %v537
    %v539 = vadd.f32 %v535, %v538
    %vm540 = vweird.f32 %v519
    %vm541 = vweird.f32 %v535
    %vm542 = vmor %vm540, %vm541
    %v543 = vsel %vm542, %v535, %v539
    %v544 = vand.u32 2147483647, %v519
    %vm545 = vcmp.eq.f32.partialorder %v544, 8.507059e+37
    %v546 = vand.u32 %v519, 2147483648
    %v547 = vor.u32 1.1754944e-38, %v546
    %v548 = vsel %vm545, %v547, %v543
    %v549 = vmul.f32 1.0, %v548
    %v550 = vrcp.pop %v520
    %v551 = vmul.f32 %v520, %v550
    %v552 = vsub.f32 1.0, %v551
    %v553 = vmul.f32 %v550, %v552
    %v554 = vadd.f32 %v550, %v553
    %vm555 = vweird.f32 %v520
    %vm556 = vweird.f32 %v550
    %vm557 = vmor %vm555, %vm556
    %v558 = vsel %vm557, %v550, %v554
    %v559 = vand.u32 2147483647, %v520
    %vm560 = vcmp.eq.f32.partialorder %v559, 8.507059e+37
    %v561 = vand.u32 %v520, 2147483648
    %v562 = vor.u32 1.1754944e-38, %v561
    %v563 = vsel %vm560, %v562, %v558
    %v564 = vmul.f32 1.0, %v563
    %v565 = vrcp.pop %v521
    %v566 = vmul.f32 %v521, %v565
    %v567 = vsub.f32 1.0, %v566
    %v568 = vmul.f32 %v565, %v567
    %v569 = vadd.f32 %v565, %v568
    %vm570 = vweird.f32 %v521
    %vm571 = vweird.f32 %v565
    %vm572 = vmor %vm570, %vm571
    %v573 = vsel %vm572, %v565, %v569
    %v574 = vand.u32 2147483647, %v521
    %vm575 = vcmp.eq.f32.partialorder %v574, 8.507059e+37
    %v576 = vand.u32 %v521, 2147483648
    %v577 = vor.u32 1.1754944e-38, %v576
    %v578 = vsel %vm575, %v577, %v573
    %v579 = vmul.f32 1.0, %v578
    %v580 = vrcp.pop %v522
    %v581 = vmul.f32 %v522, %v580
    %v582 = vsub.f32 1.0, %v581
    %v583 = vmul.f32 %v580, %v582
    %v584 = vadd.f32 %v580, %v583
    %vm585 = vweird.f32 %v522
    %vm586 = vweird.f32 %v580
    %vm587 = vmor %vm585, %vm586
    %v588 = vsel %vm587, %v580, %v584
    %v589 = vand.u32 2147483647, %v522
    %vm590 = vcmp.eq.f32.partialorder %v589, 8.507059e+37
    %v591 = vand.u32 %v522, 2147483648
    %v592 = vor.u32 1.1754944e-38, %v591
    %v593 = vsel %vm590, %v592, %v588
    %v594 = vmul.f32 1.0, %v593
    %v595 = vrcp.pop %v523
    %v596 = vmul.f32 %v523, %v595
    %v597 = vsub.f32 1.0, %v596
    %v598 = vmul.f32 %v595, %v597
    %v599 = vadd.f32 %v595, %v598
    %vm600 = vweird.f32 %v523
    %vm601 = vweird.f32 %v595
    %vm602 = vmor %vm600, %vm601
    %v603 = vsel %vm602, %v595, %v599
    %v604 = vand.u32 2147483647, %v523
    %vm605 = vcmp.eq.f32.partialorder %v604, 8.507059e+37
    %v606 = vand.u32 %v523, 2147483648
    %v607 = vor.u32 1.1754944e-38, %v606
    %v608 = vsel %vm605, %v607, %v603
    %v609 = vmul.f32 1.0, %v608
    %v610 = vrcp.pop %v524
    %v611 = vmul.f32 %v524, %v610
    %v612 = vsub.f32 1.0, %v611
    %v613 = vmul.f32 %v610, %v612
    %v614 = vadd.f32 %v610, %v613
    %vm615 = vweird.f32 %v524
    %vm616 = vweird.f32 %v610
    %vm617 = vmor %vm615, %vm616
    %v618 = vsel %vm617, %v610, %v614
    %v619 = vand.u32 2147483647, %v524
    %vm620 = vcmp.eq.f32.partialorder %v619, 8.507059e+37
    %v621 = vand.u32 %v524, 2147483648
    %v622 = vor.u32 1.1754944e-38, %v621
    %v623 = vsel %vm620, %v622, %v618
    %v624 = vmul.f32 1.0, %v623
    %v625 = vrcp.pop %v525
    %v626 = vmul.f32 %v525, %v625
    %v627 = vsub.f32 1.0, %v626
    %v628 = vmul.f32 %v625, %v627
    %v629 = vadd.f32 %v625, %v628
    %vm630 = vweird.f32 %v525
    %vm631 = vweird.f32 %v625
    %vm632 = vmor %vm630, %vm631
    %v633 = vsel %vm632, %v625, %v629
    %v634 = vand.u32 2147483647, %v525
    %vm635 = vcmp.eq.f32.partialorder %v634, 8.507059e+37
    %v636 = vand.u32 %v525, 2147483648
    %v637 = vor.u32 1.1754944e-38, %v636
    %v638 = vsel %vm635, %v637, %v633
    %v639 = vmul.f32 1.0, %v638
    %v640 = vrcp.pop %v526
    %v641 = vmul.f32 %v526, %v640
    %v642 = vsub.f32 1.0, %v641
    %v643 = vmul.f32 %v640, %v642
    %v644 = vadd.f32 %v640, %v643
    %vm645 = vweird.f32 %v526
    %vm646 = vweird.f32 %v640
    %vm647 = vmor %vm645, %vm646
    %v648 = vsel %vm647, %v640, %v644
    %v649 = vand.u32 2147483647, %v526
    %vm650 = vcmp.eq.f32.partialorder %v649, 8.507059e+37
    %v651 = vand.u32 %v526, 2147483648
    %v652 = vor.u32 1.1754944e-38, %v651
    %v653 = vsel %vm650, %v652, %v648
    %v654 = vmul.f32 1.0, %v653
    %v655 = vrcp.pop %v527
    %v656 = vmul.f32 %v527, %v655
    %v657 = vsub.f32 1.0, %v656
    %v658 = vmul.f32 %v655, %v657
    %v659 = vadd.f32 %v655, %v658
    %vm660 = vweird.f32 %v527
    %vm661 = vweird.f32 %v655
    %vm662 = vmor %vm660, %vm661
    %v663 = vsel %vm662, %v655, %v659
    %v664 = vand.u32 2147483647, %v527
    %vm665 = vcmp.eq.f32.partialorder %v664, 8.507059e+37
    %v666 = vand.u32 %v527, 2147483648
    %v667 = vor.u32 1.1754944e-38, %v666
    %v668 = vsel %vm665, %v667, %v663
    %v669 = vmul.f32 1.0, %v668
    %v670 = vrcp.pop %v528
    %v671 = vmul.f32 %v528, %v670
    %v672 = vsub.f32 1.0, %v671
    %v673 = vmul.f32 %v670, %v672
    %v674 = vadd.f32 %v670, %v673
    %vm675 = vweird.f32 %v528
    %vm676 = vweird.f32 %v670
    %vm677 = vmor %vm675, %vm676
    %v678 = vsel %vm677, %v670, %v674
    %v679 = vand.u32 2147483647, %v528
    %vm680 = vcmp.eq.f32.partialorder %v679, 8.507059e+37
    %v681 = vand.u32 %v528, 2147483648
    %v682 = vor.u32 1.1754944e-38, %v681
    %v683 = vsel %vm680, %v682, %v678
    %v684 = vmul.f32 1.0, %v683
    %v685 = vrcp.pop %v529
    %v686 = vmul.f32 %v529, %v685
    %v687 = vsub.f32 1.0, %v686
    %v688 = vmul.f32 %v685, %v687
    %v689 = vadd.f32 %v685, %v688
    %vm690 = vweird.f32 %v529
    %vm691 = vweird.f32 %v685
    %vm692 = vmor %vm690, %vm691
    %v693 = vsel %vm692, %v685, %v689
    %v694 = vand.u32 2147483647, %v529
    %vm695 = vcmp.eq.f32.partialorder %v694, 8.507059e+37
    %v696 = vand.u32 %v529, 2147483648
    %v697 = vor.u32 1.1754944e-38, %v696
    %v698 = vsel %vm695, %v697, %v693
    %v699 = vmul.f32 1.0, %v698
    %v700 = vrcp.pop %v530
    %v701 = vmul.f32 %v530, %v700
    %v702 = vsub.f32 1.0, %v701
    %v703 = vmul.f32 %v700, %v702
    %v704 = vadd.f32 %v700, %v703
    %vm705 = vweird.f32 %v530
    %vm706 = vweird.f32 %v700
    %vm707 = vmor %vm705, %vm706
    %v708 = vsel %vm707, %v700, %v704
    %v709 = vand.u32 2147483647, %v530
    %vm710 = vcmp.eq.f32.partialorder %v709, 8.507059e+37
    %v711 = vand.u32 %v530, 2147483648
    %v712 = vor.u32 1.1754944e-38, %v711
    %v713 = vsel %vm710, %v712, %v708
    %v714 = vmul.f32 1.0, %v713
    %v715 = vrcp.pop %v531
    %v716 = vmul.f32 %v531, %v715
    %v717 = vsub.f32 1.0, %v716
    %v718 = vmul.f32 %v715, %v717
    %v719 = vadd.f32 %v715, %v718
    %vm720 = vweird.f32 %v531
    %vm721 = vweird.f32 %v715
    %vm722 = vmor %vm720, %vm721
    %v723 = vsel %vm722, %v715, %v719
    %v724 = vand.u32 2147483647, %v531
    %vm725 = vcmp.eq.f32.partialorder %v724, 8.507059e+37
    %v726 = vand.u32 %v531, 2147483648
    %v727 = vor.u32 1.1754944e-38, %v726
    %v728 = vsel %vm725, %v727, %v723
    %v729 = vmul.f32 1.0, %v728
    %v730 = vrcp.pop %v532
    %v731 = vmul.f32 %v532, %v730
    %v732 = vsub.f32 1.0, %v731
    %v733 = vmul.f32 %v730, %v732
    %v734 = vadd.f32 %v730, %v733
    %vm735 = vweird.f32 %v532
    %vm736 = vweird.f32 %v730
    %vm737 = vmor %vm735, %vm736
    %v738 = vsel %vm737, %v730, %v734
    %v739 = vand.u32 2147483647, %v532
    %vm740 = vcmp.eq.f32.partialorder %v739, 8.507059e+37
    %v741 = vand.u32 %v532, 2147483648
    %v742 = vor.u32 1.1754944e-38, %v741
    %v743 = vsel %vm740, %v742, %v738
    %v744 = vmul.f32 1.0, %v743
    %v745 = vrcp.pop %v533
    %v746 = vmul.f32 %v533, %v745
    %v747 = vsub.f32 1.0, %v746
    %v748 = vmul.f32 %v745, %v747
    %v749 = vadd.f32 %v745, %v748
    %vm750 = vweird.f32 %v533
    %vm751 = vweird.f32 %v745
    %vm752 = vmor %vm750, %vm751
    %v753 = vsel %vm752, %v745, %v749
    %v754 = vand.u32 2147483647, %v533
    %vm755 = vcmp.eq.f32.partialorder %v754, 8.507059e+37
    %v756 = vand.u32 %v533, 2147483648
    %v757 = vor.u32 1.1754944e-38, %v756
    %v758 = vsel %vm755, %v757, %v753
    %v759 = vmul.f32 1.0, %v758
    %v760 = vrcp.pop %v534
    %v761 = vmul.f32 %v534, %v760
    %v762 = vsub.f32 1.0, %v761
    %v763 = vmul.f32 %v760, %v762
    %v764 = vadd.f32 %v760, %v763
    %vm765 = vweird.f32 %v534
    %vm766 = vweird.f32 %v760
    %vm767 = vmor %vm765, %vm766
    %v768 = vsel %vm767, %v760, %v764
    %v769 = vand.u32 2147483647, %v534
    %vm770 = vcmp.eq.f32.partialorder %v769, 8.507059e+37
    %v771 = vand.u32 %v534, 2147483648
    %v772 = vor.u32 1.1754944e-38, %v771
    %v773 = vsel %vm770, %v772, %v768
    %v774 = vmul.f32 1.0, %v773
    %v775 = vmul.f32 %v669, 2.0
    %v776 = vmul.f32 %v684, 2.0
    %v777 = vmul.f32 %v699, 2.0
    %v778 = vmul.f32 %v714, 2.0
    %v779 = vsub.f32 %v775, 1.0
    %v780 = vsub.f32 %v776, 1.0
    %v781 = vsub.f32 %v777, 1.0
    %v782 = vsub.f32 %v778, 1.0
    %v783 = vmul.f32 %v609, %v303
    %v784 = vmul.f32 %v624, %v304
    %v785 = vmul.f32 %v639, %v305
    %v786 = vmul.f32 %v654, %v306
    %v787 = vmul.f32 %v549, %v779
    %v788 = vmul.f32 %v564, %v780
    %v789 = vmul.f32 %v579, %v781
    %v790 = vmul.f32 %v594, %v782
    %v791 = vadd.f32 %v783, %v787
    %v792 = vadd.f32 %v784, %v788
    %v793 = vadd.f32 %v785, %v789
    %v794 = vadd.f32 %v786, %v790
    %v795 = vtanh.pop %v791
    %v796 = vtanh.pop %v792
    %v797 = vtanh.pop %v793
    %v798 = vtanh.pop %v794
    %v799 = vmul.f32 %v729, %v795
    %v800 = vmul.f32 %v744, %v796
    %v801 = vmul.f32 %v759, %v797
    %v802 = vmul.f32 %v774, %v798
    %p803 = scmp.lt.s32.totalorder 0, 1
    // Predicated region
    $region30: #{tpu_custom_call.1} parent=1 // pred_check
      %p804 = pneg %p803
    $region31: #{tpu_custom_call.1} parent=1 // pred_check_branch
      %806 = sbr.rel (%p804) target = $region33
    $region32: #{tpu_custom_call.1} parent=1 // pred_region
      %807 = vst [vmem:[#allocation3] sm:$0xff] %v799
      %808 = vst [vmem:[#allocation3 + $0x8] sm:$0xff] %v800
      %809 = vst [vmem:[#allocation3 + $0x10] sm:$0xff] %v801
      %810 = vst [vmem:[#allocation3 + $0x18] sm:$0xff] %v802
      %811 = vst [vmem:[#allocation4] sm:$0xff] %v791
      %812 = vst [vmem:[#allocation4 + $0x8] sm:$0xff] %v792
      %813 = vst [vmem:[#allocation4 + $0x10] sm:$0xff] %v793
      %814 = vst [vmem:[#allocation4 + $0x18] sm:$0xff] %v794
      %815 = vst [vmem:[#allocation5] sm:$0xff] %v799
      %816 = vst [vmem:[#allocation5 + $0x8] sm:$0xff] %v800
      %817 = vst [vmem:[#allocation5 + $0x10] sm:$0xff] %v801
      %818 = vst [vmem:[#allocation5 + $0x18] sm:$0xff] %v802
    $region33: #{tpu_custom_call.1} parent=1 // pred_fallthru
      _
    %v819 = vld [vmem:[#allocation3] sm:$0xff]
    %v820 = vld [vmem:[#allocation3 + $0x8] sm:$0xff]
    %v821 = vld [vmem:[#allocation3 + $0x10] sm:$0xff]
    %v822 = vld [vmem:[#allocation3 + $0x18] sm:$0xff]
    %823 = vst [vmem:[#allocation7] sm:$0xff] %v819
    %824 = vst [vmem:[#allocation7 + $0x8] sm:$0xff] %v820
    %825 = vst [vmem:[#allocation7 + $0x10] sm:$0xff] %v821
    %826 = vst [vmem:[#allocation7 + $0x18] sm:$0xff] %v822
    %v827 = vld [vmem:[#allocation4] sm:$0xff]
    %v828 = vld [vmem:[#allocation4 + $0x8] sm:$0xff]
    %v829 = vld [vmem:[#allocation4 + $0x10] sm:$0xff]
    %v830 = vld [vmem:[#allocation4 + $0x18] sm:$0xff]
    %831 = vst [vmem:[#allocation9] sm:$0xff] %v827
    %832 = vst [vmem:[#allocation9 + $0x8] sm:$0xff] %v828
    %833 = vst [vmem:[#allocation9 + $0x10] sm:$0xff] %v829
    %834 = vst [vmem:[#allocation9 + $0x18] sm:$0xff] %v830
    // Predicated region
    $region34: #{tpu_custom_call.1} parent=1 // pred_check
      _
    $region35: #{tpu_custom_call.1} parent=1 // pred_check_branch
      %836 = sbr.rel (0) target = $region37
    $region36: #{tpu_custom_call.1} parent=1 // pred_region
      %838 = vsyncadd [#allocation6], 0
      %s839 = sshll.u32 [#allocation5], 4
      %s840 = int_to_ptr.vmem [resolvable:$true] %s839
      %s841 = sshll.u32 %s6, 4
      %s842 = int_to_ptr.hbm [resolvable:$true] %s841
      %847 = dma.vmem_to_hbm [thread:$0]  %s840, 512, %s842, [#allocation6], 128, 128, 8
    $region37: #{tpu_custom_call.1} parent=1 // pred_fallthru
      _
    // Predicated region
    $region38: #{tpu_custom_call.1} parent=1 // pred_check
      _
    $region39: #{tpu_custom_call.1} parent=1 // pred_check_branch
      %849 = sbr.rel (0) target = $region41
    $region40: #{tpu_custom_call.1} parent=1 // pred_region
      %851 = vsyncadd [#allocation8], 0
      %s852 = sshll.u32 [#allocation7], 4
      %s853 = int_to_ptr.vmem [resolvable:$true] %s852
      %s854 = sshll.u32 %s7, 4
      %s855 = int_to_ptr.hbm [resolvable:$true] %s854
      %860 = dma.vmem_to_hbm [thread:$0]  %s853, 512, %s855, [#allocation8], 128, 128, 8
    $region41: #{tpu_custom_call.1} parent=1 // pred_fallthru
      _
    // Predicated region
    $region42: #{tpu_custom_call.1} parent=1 // pred_check
      _
    $region43: #{tpu_custom_call.1} parent=1 // pred_check_branch
      %862 = sbr.rel (0) target = $region45
    $region44: #{tpu_custom_call.1} parent=1 // pred_region
      %864 = vsyncadd [#allocation8], 0
      %s865 = sshll.u32 [#allocation9], 4
      %s866 = int_to_ptr.vmem [resolvable:$true] %s865
      %s867 = sshll.u32 %s8, 4
      %s868 = int_to_ptr.hbm [resolvable:$true] %s867
      %873 = dma.vmem_to_hbm [thread:$0]  %s866, 512, %s868, [#allocation8], 128, 128, 8
    $region45: #{tpu_custom_call.1} parent=1 // pred_fallthru
      _
    // Predicated region
    $region46: #{tpu_custom_call.1} parent=1 // pred_check
      _
    $region47: #{tpu_custom_call.1} parent=1 // pred_check_branch
      %875 = sbr.rel (0) target = $region49
    $region48: #{tpu_custom_call.1} parent=1 // pred_region
      %877 = dma.done [#allocation6], 512
    $region49: #{tpu_custom_call.1} parent=1 // pred_fallthru
      _
    // Predicated region
    $region50: #{tpu_custom_call.1} parent=1 // pred_check
      _
    $region51: #{tpu_custom_call.1} parent=1 // pred_check_branch
      %879 = sbr.rel (0) target = $region53
    $region52: #{tpu_custom_call.1} parent=1 // pred_region
      %881 = dma.done [#allocation8], 512
    $region53: #{tpu_custom_call.1} parent=1 // pred_fallthru
      _
    // Predicated region
    $region54: #{tpu_custom_call.1} parent=1 // pred_check
      _
    $region55: #{tpu_custom_call.1} parent=1 // pred_check_branch
      %883 = sbr.rel (0) target = $region57
    $region56: #{tpu_custom_call.1} parent=1 // pred_region
      %885 = dma.done [#allocation8], 512
    $region57: #{tpu_custom_call.1} parent=1 // pred_fallthru
      _
    %886 = vsyncpa [#allocation6], 1
    %887 = vsyncpa [#allocation8], 1

</llo_original>
